<compile_context>
chip_gen: v5e
topology: v5e:2x2
jax: 0.10.0
libtpu: 0.0.40
codegen_flags: <defaults>
</compile_context>

<pallas_src>
import functools

import jax
import jax.numpy as jnp
from jax.experimental import pallas as pl
from jax.experimental.pallas import tpu as pltpu


def _approx_net_kernel(negative_slope, x_ref, s_ref, wbd_ref, wmin_ref,
                       bbd_ref, w2bd_ref, b2_ref, out_ref):
    xp = x_ref[...]                                        # (TBp, P*F) f32, lane-dense

    # linear_1 (with both 1x1 convs folded in) for all P packed samples per row.
    z = jnp.dot(xp, wbd_ref[...], preferred_element_type=jnp.float32)      # (TBp, P*L)

    # Per-sample min over the F features: log2(F) rounds of
    #   m <- min(m, m @ S_k)   with (m @ S_k)[:, j] == m[:, j + k]  (exact 0/1 matrix).
    # After the cascade, lane F*s holds min(x[sample s, :]).  Every other lane is
    # routed into an all-zero row of wmin_ref, so no masking is needed.
    m = xp
    for j in range(s_ref.shape[0]):
        m = jnp.minimum(m, jnp.dot(m, s_ref[j], preferred_element_type=jnp.float32))
    z = z + jnp.dot(m, wmin_ref[...], preferred_element_type=jnp.float32)  # + min * w1min
    z = z + bbd_ref[...]                                                   # + b1 (folded)

    # LeakyReLU (negative_slope = 0.01 is the nn.LeakyReLU default).
    z = jnp.where(z >= 0, z, negative_slope * z)

    # linear_2 (out_features=1) as a block-diagonal (P*L, P) matmul, + bias, ReLU.
    y = jnp.dot(z, w2bd_ref[...], preferred_element_type=jnp.float32)      # (TBp, P)
    out_ref[...] = jnp.maximum(y + b2_ref[...], 0.0)


def _fold_convs(params):
    """Fold the two kernel_size=1 convs into linear_1 (exact identity)."""
    c1w, c1b, c2w, c2b, W1, b1, W2, b2 = params
    C2 = c2w.shape[0]
    L = b1.shape[0]
    F = (W1.shape[1] - 1) // C2
    eff_w = c2w @ c1w                                      # (C2,)
    eff_b = c2w @ c1b + c2b                                # (C2,)
    W1a = W1[:, :C2 * F].reshape(L, C2, F)
    W_eff = jnp.einsum('lcf,c->fl', W1a, eff_w)            # (F, L)
    b_eff = b1 + jnp.einsum('lcf,c->l', W1a, eff_b)        # (L,)
    w1min = W1[:, C2 * F]                                  # (L,) column multiplying min(x)
    return W_eff, b_eff, w1min


def approx_net_forward(x, params, *, batch_tile=16384, negative_slope=0.01):
    """x: (B, F) float32. params = (c1w, c1b, c2w, c2b, W1, b1, W2, b2) in torch layouts."""
    c1w, c1b, c2w, c2b, W1, b1, W2, b2 = params
    B, F = x.shape
    L = b1.shape[0]
    W_eff, b_eff, w1min = _fold_convs(params)

    def _dense_tail(xt):                                   # pure-JAX path with folded weights
        mt = jnp.min(xt, axis=1, keepdims=True)
        zt = xt @ W_eff + mt * w1min[None, :] + b_eff[None, :]
        zt = jnp.where(zt >= 0, zt, negative_slope * zt)
        return jnp.maximum(zt @ W2.T + b2, 0.0)            # (rows, 1)

    if 128 % F != 0:
        # TODO(synk): feature counts that do not divide 128 fall back to pure JAX.
        return _dense_tail(x)

    P = 128 // F                                           # samples packed per 128-lane row
    n_rows = B // P
    B_main = n_rows * P
    if B_main == 0:                                        # fewer samples than one packed row
        return _dense_tail(x)

    dt = x.dtype
    # ---- Packed (block-diagonal) weights; all stay VMEM-resident across the grid.
    eyeP = jnp.eye(P, dtype=dt)
    W_bd = jnp.kron(eyeP, W_eff.astype(dt))                            # (P*F, P*L)
    min_blk = jnp.zeros((F, L), dt).at[0].set(w1min.astype(dt))
    W_minbd = jnp.kron(eyeP, min_blk)                                  # (P*F, P*L)
    b_bd = jnp.tile(b_eff.astype(dt), P)[None, :]                      # (1, P*L)
    W2_bd = jnp.kron(eyeP, W2.T.astype(dt))                            # (P*L, P)
    b2_row = jnp.broadcast_to(b2.astype(dt).reshape(1, 1), (1, P))     # (1, P)
    # Exact lane-shift matrices for the min cascade (F is a power of two here).
    n_shift = max(F.bit_length() - 1, 0)
    shifts = [jnp.eye(P * F, k=-(1 << j), dtype=dt) for j in reversed(range(n_shift))]
    if not shifts:                                                     # F == 1: min(x) == x
        shifts = [jnp.eye(P * F, dtype=dt)]
    S_all = jnp.stack(shifts)                                          # (n_shift, P*F, P*F)

    # ---- Free packing reshape (row-major contiguous) + batch tiling.
    x_main = x if B_main == B else x[:B_main]
    xp = x_main.reshape(n_rows, P * F)

    tbp_cap = max(8, batch_tile // P)                      # packed rows per grid step
    if n_rows <= tbp_cap:
        tbp = n_rows                                       # single tile (== full dim, legal)
    else:
        # cap the tile so large inputs get >= ~8 grid tiles (v7x megacore sharding)
        tbp = min(tbp_cap, ((pl.cdiv(n_rows, 8) + 7) // 8) * 8)
    num_tiles = pl.cdiv(n_rows, tbp)

    kernel = functools.partial(_approx_net_kernel, negative_slope)
    res2d = lambda i: (0, 0)                               # resident 2-D weights

    out_main = pl.pallas_call(
        kernel,
        out_shape=jax.ShapeDtypeStruct((n_rows, P), dt),
        grid=(num_tiles,),
        in_specs=[
            pl.BlockSpec((tbp, P * F), lambda i: (i, 0)),          # packed x tile
            pl.BlockSpec(S_all.shape, lambda i: (0, 0, 0)),        # shift matrices (resident)
            pl.BlockSpec(W_bd.shape, res2d),                       # block-diag linear_1
            pl.BlockSpec(W_minbd.shape, res2d),                    # min -> w1min routing
            pl.BlockSpec(b_bd.shape, res2d),                       # folded bias
            pl.BlockSpec(W2_bd.shape, res2d),                      # block-diag linear_2
            pl.BlockSpec(b2_row.shape, res2d),                     # linear_2 bias
        ],
        out_specs=pl.BlockSpec((tbp, P), lambda i: (i, 0)),
        compiler_params=pltpu.CompilerParams(
            dimension_semantics=("parallel",),
            vmem_limit_bytes=32 * 1024 * 1024,
        ),
    )(xp, S_all, W_bd, W_minbd, b_bd, W2_bd, b2_row)

    y_main = out_main.reshape(B_main, 1)                   # flat order == sample order
    if B_main == B:
        return y_main
    return jnp.concatenate([y_main, _dense_tail(x[B_main:])], axis=0)


def approx_net_ref(x, params):
    """Pure-JAX reference matching the PyTorch forward exactly."""
    c1w, c1b, c2w, c2b, W1, b1, W2, b2 = params
    B = x.shape[0]
    min_v = jnp.min(x, axis=1)                                      # (B,)
    h1 = x[:, None, :] * c1w[None, :, None] + c1b[None, :, None]    # (B, C1, F)
    h2 = jnp.einsum('oc,bcf->bof', c2w, h1) + c2b[None, :, None]    # (B, C2, F)
    cat = jnp.concatenate([h2.reshape(B, -1), min_v[:, None]], axis=1)
    z = cat @ W1.T + b1
    z = jnp.where(z >= 0, z, 0.01 * z)                              # LeakyReLU
    return jnp.maximum(z @ W2.T + b2, 0.0)                          # ReLU


if __name__ == "__main__":
    # Module hyperparams: input_channels=1 (forced by forward's unsqueeze(1)),
    # input_features=16, conv_filters_1=4, conv_filters_2=8, linear_features=32.
    B, F = 64, 16
    C1, C2, L = 4, 8, 32

    key = jax.random.PRNGKey(0)
    ks = jax.random.split(key, 9)
    x = jax.random.normal(ks[0], (B, F), jnp.float32)

    # Deterministic synthetic parameters (torch layouts, kernel_size=1 squeezed).
    c1w = 0.2 * jax.random.normal(ks[1], (C1,), jnp.float32)           # Conv1d(1, C1, 1).weight
    c1b = 0.1 * jax.random.normal(ks[2], (C1,), jnp.float32)
    c2w = 0.2 * jax.random.normal(ks[3], (C2, C1), jnp.float32)        # Conv1d(C1, C2, 1).weight
    c2b = 0.1 * jax.random.normal(ks[4], (C2,), jnp.float32)
    W1 = 0.1 * jax.random.normal(ks[5], (L, C2 * F + 1), jnp.float32)  # Linear(C2*F+1, L)
    b1 = 0.1 * jax.random.normal(ks[6], (L,), jnp.float32)
    W2 = 0.1 * jax.random.normal(ks[7], (1, L), jnp.float32)           # Linear(L, 1)
    b2 = 0.1 * jax.random.normal(ks[8], (1,), jnp.float32)

    params = (c1w, c1b, c2w, c2b, W1, b1, W2, b2)

    out = approx_net_forward(x, params)
    out = jax.block_until_ready(out)

    ref = approx_net_ref(x, params)
    assert out.shape == (B, 1), out.shape
    assert jnp.allclose(out, ref, atol=5e-4, rtol=5e-4), (out, ref)
    print("KERNEL_OK")
</pallas_src>

<mosaic_0001>
module attributes {stable_mosaic.version = 11 : i64} {
  func.func @_approx_net_kernel(%arg0: i32, %arg1: memref<8x128xf32, #tpu.memory_space<vmem>>, %arg2: memref<4x128x128xf32, #tpu.memory_space<vmem>>, %arg3: memref<128x256xf32, #tpu.memory_space<vmem>>, %arg4: memref<128x256xf32, #tpu.memory_space<vmem>>, %arg5: memref<1x256xf32, #tpu.memory_space<vmem>>, %arg6: memref<256x8xf32, #tpu.memory_space<vmem>>, %arg7: memref<1x8xf32, #tpu.memory_space<vmem>>, %arg8: memref<8x8xf32, #tpu.memory_space<vmem>>) attributes {dimension_semantics = [#tpu.dimension_semantics<parallel>], iteration_bounds = array<i64: 1>, scalar_prefetch = 0 : i64, scratch_operands = 0 : i64, tpu.core_type = #tpu.core_type<tc>, window_params = [{transform_indices = @transform_0, window_bounds = array<i64: 8, 128>}, {pipeline_mode = #tpu.pipeline_mode<synchronous>, transform_indices = @transform_1, window_bounds = array<i64: 4, 128, 128>}, {pipeline_mode = #tpu.pipeline_mode<synchronous>, transform_indices = @transform_2, window_bounds = array<i64: 128, 256>}, {pipeline_mode = #tpu.pipeline_mode<synchronous>, transform_indices = @transform_3, window_bounds = array<i64: 128, 256>}, {pipeline_mode = #tpu.pipeline_mode<synchronous>, transform_indices = @transform_4, window_bounds = array<i64: 1, 256>}, {pipeline_mode = #tpu.pipeline_mode<synchronous>, transform_indices = @transform_5, window_bounds = array<i64: 256, 8>}, {pipeline_mode = #tpu.pipeline_mode<synchronous>, transform_indices = @transform_6, window_bounds = array<i64: 1, 8>}, {transform_indices = @transform_7, window_bounds = array<i64: 8, 8>}]} {
    %c0 = arith.constant 0 : index
    %c0_0 = arith.constant 0 : index
    %0 = vector.load %arg1[%c0, %c0_0] : memref<8x128xf32, #tpu.memory_space<vmem>>, vector<8x128xf32>
    %c0_1 = arith.constant 0 : index
    %c0_2 = arith.constant 0 : index
    %1 = vector.load %arg3[%c0_1, %c0_2] : memref<128x256xf32, #tpu.memory_space<vmem>>, vector<128x256xf32>
    %cst = arith.constant dense<0.000000e+00> : vector<8x256xf32>
    %2 = tpu.matmul %0, %1, %cst {dimension_numbers = #tpu.dot_dimension_numbers<[1], [0], [0], [1], [0, 0, 1, 1], [], []>} : vector<8x128xf32>, vector<128x256xf32>, vector<8x256xf32> -> vector<8x256xf32>
    %c0_3 = arith.constant 0 : index
    %c0_4 = arith.constant 0 : index
    %c0_5 = arith.constant 0 : index
    %3 = vector.load %arg2[%c0_3, %c0_4, %c0_5] : memref<4x128x128xf32, #tpu.memory_space<vmem>>, vector<1x128x128xf32>
    %4 = vector.shape_cast %3 : vector<1x128x128xf32> to vector<128x128xf32>
    %cst_6 = arith.constant dense<0.000000e+00> : vector<8x128xf32>
    %5 = tpu.matmul %0, %4, %cst_6 {dimension_numbers = #tpu.dot_dimension_numbers<[1], [0], [0], [1], [0, 0, 1, 1], [], []>} : vector<8x128xf32>, vector<128x128xf32>, vector<8x128xf32> -> vector<8x128xf32>
    %6 = arith.minimumf %0, %5 : vector<8x128xf32>
    %c1 = arith.constant 1 : index
    %c0_7 = arith.constant 0 : index
    %c0_8 = arith.constant 0 : index
    %7 = vector.load %arg2[%c1, %c0_7, %c0_8] : memref<4x128x128xf32, #tpu.memory_space<vmem>>, vector<1x128x128xf32>
    %8 = vector.shape_cast %7 : vector<1x128x128xf32> to vector<128x128xf32>
    %cst_9 = arith.constant dense<0.000000e+00> : vector<8x128xf32>
    %9 = tpu.matmul %6, %8, %cst_9 {dimension_numbers = #tpu.dot_dimension_numbers<[1], [0], [0], [1], [0, 0, 1, 1], [], []>} : vector<8x128xf32>, vector<128x128xf32>, vector<8x128xf32> -> vector<8x128xf32>
    %10 = arith.minimumf %6, %9 : vector<8x128xf32>
    %c2 = arith.constant 2 : index
    %c0_10 = arith.constant 0 : index
    %c0_11 = arith.constant 0 : index
    %11 = vector.load %arg2[%c2, %c0_10, %c0_11] : memref<4x128x128xf32, #tpu.memory_space<vmem>>, vector<1x128x128xf32>
    %12 = vector.shape_cast %11 : vector<1x128x128xf32> to vector<128x128xf32>
    %cst_12 = arith.constant dense<0.000000e+00> : vector<8x128xf32>
    %13 = tpu.matmul %10, %12, %cst_12 {dimension_numbers = #tpu.dot_dimension_numbers<[1], [0], [0], [1], [0, 0, 1, 1], [], []>} : vector<8x128xf32>, vector<128x128xf32>, vector<8x128xf32> -> vector<8x128xf32>
    %14 = arith.minimumf %10, %13 : vector<8x128xf32>
    %c3 = arith.constant 3 : index
    %c0_13 = arith.constant 0 : index
    %c0_14 = arith.constant 0 : index
    %15 = vector.load %arg2[%c3, %c0_13, %c0_14] : memref<4x128x128xf32, #tpu.memory_space<vmem>>, vector<1x128x128xf32>
    %16 = vector.shape_cast %15 : vector<1x128x128xf32> to vector<128x128xf32>
    %cst_15 = arith.constant dense<0.000000e+00> : vector<8x128xf32>
    %17 = tpu.matmul %14, %16, %cst_15 {dimension_numbers = #tpu.dot_dimension_numbers<[1], [0], [0], [1], [0, 0, 1, 1], [], []>} : vector<8x128xf32>, vector<128x128xf32>, vector<8x128xf32> -> vector<8x128xf32>
    %18 = arith.minimumf %14, %17 : vector<8x128xf32>
    %c0_16 = arith.constant 0 : index
    %c0_17 = arith.constant 0 : index
    %19 = vector.load %arg4[%c0_16, %c0_17] : memref<128x256xf32, #tpu.memory_space<vmem>>, vector<128x256xf32>
    %cst_18 = arith.constant dense<0.000000e+00> : vector<8x256xf32>
    %20 = tpu.matmul %18, %19, %cst_18 {dimension_numbers = #tpu.dot_dimension_numbers<[1], [0], [0], [1], [0, 0, 1, 1], [], []>} : vector<8x128xf32>, vector<128x256xf32>, vector<8x256xf32> -> vector<8x256xf32>
    %21 = arith.addf %2, %20 : vector<8x256xf32>
    %c0_19 = arith.constant 0 : index
    %c0_20 = arith.constant 0 : index
    %22 = vector.load %arg5[%c0_19, %c0_20] : memref<1x256xf32, #tpu.memory_space<vmem>>, vector<1x256xf32>
    %23 = vector.broadcast %22 : vector<1x256xf32> to vector<8x256xf32>
    %24 = arith.addf %21, %23 : vector<8x256xf32>
    %cst_21 = arith.constant 0.000000e+00 : f32
    %25 = vector.broadcast %cst_21 : f32 to vector<8x256xf32>
    %26 = arith.cmpf oge, %24, %25 : vector<8x256xf32>
    %cst_22 = arith.constant 0.00999999977 : f32
    %27 = vector.broadcast %cst_22 : f32 to vector<8x256xf32>
    %28 = arith.mulf %27, %24 : vector<8x256xf32>
    %29 = arith.select %26, %24, %28 : vector<8x256xi1>, vector<8x256xf32>
    %c0_23 = arith.constant 0 : index
    %c0_24 = arith.constant 0 : index
    %30 = vector.load %arg6[%c0_23, %c0_24] : memref<256x8xf32, #tpu.memory_space<vmem>>, vector<256x8xf32>
    %cst_25 = arith.constant dense<0.000000e+00> : vector<8x8xf32>
    %31 = tpu.matmul %29, %30, %cst_25 {dimension_numbers = #tpu.dot_dimension_numbers<[1], [0], [0], [1], [0, 0, 1, 1], [], []>} : vector<8x256xf32>, vector<256x8xf32>, vector<8x8xf32> -> vector<8x8xf32>
    %c0_26 = arith.constant 0 : index
    %c0_27 = arith.constant 0 : index
    %32 = vector.load %arg7[%c0_26, %c0_27] : memref<1x8xf32, #tpu.memory_space<vmem>>, vector<1x8xf32>
    %33 = vector.broadcast %32 : vector<1x8xf32> to vector<8x8xf32>
    %34 = arith.addf %31, %33 : vector<8x8xf32>
    %cst_28 = arith.constant 0.000000e+00 : f32
    %35 = vector.broadcast %cst_28 : f32 to vector<8x8xf32>
    %36 = arith.maximumf %34, %35 : vector<8x8xf32>
    %c0_29 = arith.constant 0 : index
    %c0_30 = arith.constant 0 : index
    %37 = vector.load %arg8[%c0_29, %c0_30] : memref<8x8xf32, #tpu.memory_space<vmem>>, vector<8x8xf32>
    tpu.vector_store %arg8[%c0_29, %c0_30], %36 {strides = array<i32>} : memref<8x8xf32, #tpu.memory_space<vmem>>, vector<8x8xf32>,
    return
  }
  func.func @transform_0(%arg0: i32) -> (i32, i32) {
    %c0_i32 = arith.constant 0 : i32
    %c0_i32_0 = arith.constant 0 : i32
    return %arg0, %c0_i32 : i32, i32
  }
  func.func @transform_1(%arg0: i32) -> (i32, i32, i32) {
    %c0_i32 = arith.constant 0 : i32
    %c0_i32_0 = arith.constant 0 : i32
    %c0_i32_1 = arith.constant 0 : i32
    %c0_i32_2 = arith.constant 0 : i32
    return %c0_i32, %c0_i32_0, %c0_i32_1 : i32, i32, i32
  }
  func.func @transform_2(%arg0: i32) -> (i32, i32) {
    %c0_i32 = arith.constant 0 : i32
    %c0_i32_0 = arith.constant 0 : i32
    %c0_i32_1 = arith.constant 0 : i32
    return %c0_i32, %c0_i32_0 : i32, i32
  }
  func.func @transform_3(%arg0: i32) -> (i32, i32) {
    %c0_i32 = arith.constant 0 : i32
    %c0_i32_0 = arith.constant 0 : i32
    %c0_i32_1 = arith.constant 0 : i32
    return %c0_i32, %c0_i32_0 : i32, i32
  }
  func.func @transform_4(%arg0: i32) -> (i32, i32) {
    %c0_i32 = arith.constant 0 : i32
    %c0_i32_0 = arith.constant 0 : i32
    %c0_i32_1 = arith.constant 0 : i32
    return %c0_i32, %c0_i32_0 : i32, i32
  }
  func.func @transform_5(%arg0: i32) -> (i32, i32) {
    %c0_i32 = arith.constant 0 : i32
    %c0_i32_0 = arith.constant 0 : i32
    %c0_i32_1 = arith.constant 0 : i32
    return %c0_i32, %c0_i32_0 : i32, i32
  }
  func.func @transform_6(%arg0: i32) -> (i32, i32) {
    %c0_i32 = arith.constant 0 : i32
    %c0_i32_0 = arith.constant 0 : i32
    %c0_i32_1 = arith.constant 0 : i32
    return %c0_i32, %c0_i32_0 : i32, i32
  }
  func.func @transform_7(%arg0: i32) -> (i32, i32) {
    %c0_i32 = arith.constant 0 : i32
    %c0_i32_0 = arith.constant 0 : i32
    return %arg0, %c0_i32 : i32, i32
  }
}

</mosaic_0001>

<llo_original>
// kernel: tpu_custom_call.1
$region0: #{tpu_custom_call.1}
  #allocation0 [shape = 'u32[]', space=smem, size = 0x4, offset = 0x4, fixed_abs, tag = 'smem constant byte address 0x4 - core index']
  #allocation1 [shape = 'u32[72,128]{1,0:T(1,128)}', space=vmem, size = 0x9000, scoped, tag = 'internal scratch']
  %s0 = inlined_call_operand.vmem [shape: f32[8,128], index: 0, kind: input, shape index: {}]
  %s1 = inlined_call_operand.hbm [shape: f32[4,128,128], index: 1, kind: input, shape index: {}]
  %s2 = inlined_call_operand.vmem [shape: f32[128,256], index: 2, kind: input, shape index: {}]
  %s3 = inlined_call_operand.hbm [shape: f32[128,256], index: 3, kind: input, shape index: {}]
  %s4 = inlined_call_operand.vmem [shape: f32[1,256], index: 4, kind: input, shape index: {}]
  %s5 = inlined_call_operand.vmem [shape: f32[256,8], index: 5, kind: input, shape index: {}]
  %s6 = inlined_call_operand.vmem [shape: f32[1,8], index: 6, kind: input, shape index: {}]
  %s7 = inlined_call_operand.hbm [shape: f32[8,8], index: 7, kind: output, shape index: {}]
  %s8 = sld [smem:[#allocation0]]
  $region46: #{tpu_custom_call.1} parent=0
    _
  %s10 = ssub.s32 1, %s8
  %s11 = scalar_select 0, %s10, %s8
  $region1: #{tpu_custom_call.1} parent=0
    #allocation2 [shape = 'u8[262144]{0}', space=vmem, size = 0x40000, scoped, tag = 'input window, operand 1, single buffered']
    #allocation3 [shape = 's32[1]{0}', space=sflag, size = 0x4, scoped, tag = 'scoped memory for tpu_custom_call.1']
    #allocation4 [shape = 's32[1]{0}', space=sflag, size = 0x4, scoped, tag = 'scoped memory for tpu_custom_call.1']
    #allocation5 [shape = 'u8[131072]{0}', space=vmem, size = 0x20000, scoped, tag = 'input window, operand 3, single buffered']
    #allocation6 [shape = 's32[1]{0}', space=sflag, size = 0x4, scoped, tag = 'scoped memory for tpu_custom_call.1']
    #allocation7 [shape = 'u8[4096]{0}', space=vmem, size = 0x1000, scoped, tag = 'output window, operand 0, single buffered']
    %12 = vsyncpa [#allocation3], 0
    %13 = vsyncpa [#allocation6], 0
    %14 = vsyncpa [#allocation4], 0
    // Predicated region
    $region2: #{tpu_custom_call.1} parent=1 // pred_check
      _
    $region3: #{tpu_custom_call.1} parent=1 // pred_check_branch
      %16 = sbr.rel (0) target = $region5
    $region4: #{tpu_custom_call.1} parent=1 // pred_region
      _
    $region5: #{tpu_custom_call.1} parent=1 // pred_fallthru
      _
    // Predicated region
    $region6: #{tpu_custom_call.1} parent=1 // pred_check
      _
    $region7: #{tpu_custom_call.1} parent=1 // pred_check_branch
      %18 = sbr.rel (0) target = $region9
    $region8: #{tpu_custom_call.1} parent=1 // pred_region
      %20 = vsyncadd [#allocation3], 0
      %s21 = sshll.u32 %s1, 4
      %s22 = int_to_ptr.hbm [resolvable:$true] %s21
      %s23 = sshll.u32 [#allocation2], 4
      %s24 = int_to_ptr.vmem [resolvable:$true] %s23
      %29 = dma.hbm_to_vmem [thread:$0]  %s22, 8192, %s24, [#allocation3], 128, 128, 8
    $region9: #{tpu_custom_call.1} parent=1 // pred_fallthru
      _
    // Predicated region
    $region10: #{tpu_custom_call.1} parent=1 // pred_check
      _
    $region11: #{tpu_custom_call.1} parent=1 // pred_check_branch
      %31 = sbr.rel (0) target = $region13
    $region12: #{tpu_custom_call.1} parent=1 // pred_region
      _
    $region13: #{tpu_custom_call.1} parent=1 // pred_fallthru
      _
    // Predicated region
    $region14: #{tpu_custom_call.1} parent=1 // pred_check
      _
    $region15: #{tpu_custom_call.1} parent=1 // pred_check_branch
      %33 = sbr.rel (0) target = $region17
    $region16: #{tpu_custom_call.1} parent=1 // pred_region
      %35 = vsyncadd [#allocation6], 0
      %s36 = sshll.u32 %s3, 4
      %s37 = int_to_ptr.hbm [resolvable:$true] %s36
      %s38 = sshll.u32 [#allocation5], 4
      %s39 = int_to_ptr.vmem [resolvable:$true] %s38
      %44 = dma.hbm_to_vmem [thread:$0]  %s37, 4096, %s39, [#allocation6], 256, 256, 16
    $region17: #{tpu_custom_call.1} parent=1 // pred_fallthru
      _
    // Predicated region
    $region18: #{tpu_custom_call.1} parent=1 // pred_check
      _
    $region19: #{tpu_custom_call.1} parent=1 // pred_check_branch
      %46 = sbr.rel (0) target = $region21
    $region20: #{tpu_custom_call.1} parent=1 // pred_region
      _
    $region21: #{tpu_custom_call.1} parent=1 // pred_fallthru
      _
    // Predicated region
    $region22: #{tpu_custom_call.1} parent=1 // pred_check
      _
    $region23: #{tpu_custom_call.1} parent=1 // pred_check_branch
      %48 = sbr.rel (0) target = $region25
    $region24: #{tpu_custom_call.1} parent=1 // pred_region
      _
    $region25: #{tpu_custom_call.1} parent=1 // pred_fallthru
      _
    // Predicated region
    $region26: #{tpu_custom_call.1} parent=1 // pred_check
      _
    $region27: #{tpu_custom_call.1} parent=1 // pred_check_branch
      %50 = sbr.rel (0) target = $region29
    $region28: #{tpu_custom_call.1} parent=1 // pred_region
      _
    $region29: #{tpu_custom_call.1} parent=1 // pred_fallthru
      _
    // Predicated region
    $region30: #{tpu_custom_call.1} parent=1 // pred_check
      _
    $region31: #{tpu_custom_call.1} parent=1 // pred_check_branch
      %52 = sbr.rel (0) target = $region33
    $region32: #{tpu_custom_call.1} parent=1 // pred_region
      %54 = dma.done [#allocation3], 8192
    $region33: #{tpu_custom_call.1} parent=1 // pred_fallthru
      _
    // Predicated region
    $region34: #{tpu_custom_call.1} parent=1 // pred_check
      _
    $region35: #{tpu_custom_call.1} parent=1 // pred_check_branch
      %56 = sbr.rel (0) target = $region37
    $region36: #{tpu_custom_call.1} parent=1 // pred_region
      %58 = dma.done [#allocation6], 4096
    $region37: #{tpu_custom_call.1} parent=1 // pred_fallthru
      _
    %v59 = vld [vmem:[%s0] sm:$0xff]
    %v60 = vld [vmem:[%s2] sm:$0xff]
    %v61 = vld [vmem:[%s2 + $0x8] sm:$0xff]
    %v62 = vld [vmem:[%s2 + $0x10] sm:$0xff]
    %v63 = vld [vmem:[%s2 + $0x18] sm:$0xff]
    %v64 = vld [vmem:[%s2 + $0x20] sm:$0xff]
    %v65 = vld [vmem:[%s2 + $0x28] sm:$0xff]
    %v66 = vld [vmem:[%s2 + $0x30] sm:$0xff]
    %v67 = vld [vmem:[%s2 + $0x38] sm:$0xff]
    %v68 = vld [vmem:[%s2 + $0x40] sm:$0xff]
    %v69 = vld [vmem:[%s2 + $0x48] sm:$0xff]
    %v70 = vld [vmem:[%s2 + $0x50] sm:$0xff]
    %v71 = vld [vmem:[%s2 + $0x58] sm:$0xff]
    %v72 = vld [vmem:[%s2 + $0x60] sm:$0xff]
    %v73 = vld [vmem:[%s2 + $0x68] sm:$0xff]
    %v74 = vld [vmem:[%s2 + $0x70] sm:$0xff]
    %v75 = vld [vmem:[%s2 + $0x78] sm:$0xff]
    %v76 = vld [vmem:[%s2 + $0x80] sm:$0xff]
    %v77 = vld [vmem:[%s2 + $0x88] sm:$0xff]
    %v78 = vld [vmem:[%s2 + $0x90] sm:$0xff]
    %v79 = vld [vmem:[%s2 + $0x98] sm:$0xff]
    %v80 = vld [vmem:[%s2 + $0xa0] sm:$0xff]
    %v81 = vld [vmem:[%s2 + $0xa8] sm:$0xff]
    %v82 = vld [vmem:[%s2 + $0xb0] sm:$0xff]
    %v83 = vld [vmem:[%s2 + $0xb8] sm:$0xff]
    %v84 = vld [vmem:[%s2 + $0xc0] sm:$0xff]
    %v85 = vld [vmem:[%s2 + $0xc8] sm:$0xff]
    %v86 = vld [vmem:[%s2 + $0xd0] sm:$0xff]
    %v87 = vld [vmem:[%s2 + $0xd8] sm:$0xff]
    %v88 = vld [vmem:[%s2 + $0xe0] sm:$0xff]
    %v89 = vld [vmem:[%s2 + $0xe8] sm:$0xff]
    %v90 = vld [vmem:[%s2 + $0xf0] sm:$0xff]
    %v91 = vld [vmem:[%s2 + $0xf8] sm:$0xff]
    %v92 = vld [vmem:[#allocation2] sm:$0xff]
    %v93 = vld [vmem:[#allocation2 + $0x8] sm:$0xff]
    %v94 = vld [vmem:[#allocation2 + $0x10] sm:$0xff]
    %v95 = vld [vmem:[#allocation2 + $0x18] sm:$0xff]
    %v96 = vld [vmem:[#allocation2 + $0x20] sm:$0xff]
    %v97 = vld [vmem:[#allocation2 + $0x28] sm:$0xff]
    %v98 = vld [vmem:[#allocation2 + $0x30] sm:$0xff]
    %v99 = vld [vmem:[#allocation2 + $0x38] sm:$0xff]
    %v100 = vld [vmem:[#allocation2 + $0x40] sm:$0xff]
    %v101 = vld [vmem:[#allocation2 + $0x48] sm:$0xff]
    %v102 = vld [vmem:[#allocation2 + $0x50] sm:$0xff]
    %v103 = vld [vmem:[#allocation2 + $0x58] sm:$0xff]
    %v104 = vld [vmem:[#allocation2 + $0x60] sm:$0xff]
    %v105 = vld [vmem:[#allocation2 + $0x68] sm:$0xff]
    %v106 = vld [vmem:[#allocation2 + $0x70] sm:$0xff]
    %v107 = vld [vmem:[#allocation2 + $0x78] sm:$0xff]
    %108 = vmatpush.msra.mxu0 %v107
    %109 = vmatpush.msra.mxu0 %v106
    %110 = vmatpush.msra.mxu0 %v105
    %111 = vmatpush.msra.mxu0 %v104
    %112 = vmatpush.msra.mxu0 %v103
    %113 = vmatpush.msra.mxu0 %v102
    %114 = vmatpush.msra.mxu0 %v101
    %115 = vmatpush.msra.mxu0 %v100
    %116 = vmatpush.msra.mxu0 %v99
    %117 = vmatpush.msra.mxu0 %v98
    %118 = vmatpush.msra.mxu0 %v97
    %119 = vmatpush.msra.mxu0 %v96
    %120 = vmatpush.msra.mxu0 %v95
    %121 = vmatpush.msra.mxu0 %v94
    %122 = vmatpush.msra.mxu0 %v93
    %123 = vmatpush.msra.mxu0 %v92
    %124 = vmatmul.f32.gmra.mxu0 %v59
    %v125 = vpop.f32.mrf.mxu0
    %v126 = vadd.f32 0.0, %v125
    %127 = vdwg.mxu0
    %v128 = vmin.f32 %v59, %v126
    %s129 = scalar_lea.vmem [#allocation2], 128
    %v130 = vld [vmem:[%s129] sm:$0xff]
    %v131 = vld [vmem:[%s129 + $0x8] sm:$0xff]
    %v132 = vld [vmem:[%s129 + $0x10] sm:$0xff]
    %v133 = vld [vmem:[%s129 + $0x18] sm:$0xff]
    %v134 = vld [vmem:[%s129 + $0x20] sm:$0xff]
    %v135 = vld [vmem:[%s129 + $0x28] sm:$0xff]
    %v136 = vld [vmem:[%s129 + $0x30] sm:$0xff]
    %v137 = vld [vmem:[%s129 + $0x38] sm:$0xff]
    %v138 = vld [vmem:[%s129 + $0x40] sm:$0xff]
    %v139 = vld [vmem:[%s129 + $0x48] sm:$0xff]
    %v140 = vld [vmem:[%s129 + $0x50] sm:$0xff]
    %v141 = vld [vmem:[%s129 + $0x58] sm:$0xff]
    %v142 = vld [vmem:[%s129 + $0x60] sm:$0xff]
    %v143 = vld [vmem:[%s129 + $0x68] sm:$0xff]
    %v144 = vld [vmem:[%s129 + $0x70] sm:$0xff]
    %v145 = vld [vmem:[%s129 + $0x78] sm:$0xff]
    %146 = vmatpush.msra.mxu0 %v145
    %147 = vmatpush.msra.mxu0 %v144
    %148 = vmatpush.msra.mxu0 %v143
    %149 = vmatpush.msra.mxu0 %v142
    %150 = vmatpush.msra.mxu0 %v141
    %151 = vmatpush.msra.mxu0 %v140
    %152 = vmatpush.msra.mxu0 %v139
    %153 = vmatpush.msra.mxu0 %v138
    %154 = vmatpush.msra.mxu0 %v137
    %155 = vmatpush.msra.mxu0 %v136
    %156 = vmatpush.msra.mxu0 %v135
    %157 = vmatpush.msra.mxu0 %v134
    %158 = vmatpush.msra.mxu0 %v133
    %159 = vmatpush.msra.mxu0 %v132
    %160 = vmatpush.msra.mxu0 %v131
    %161 = vmatpush.msra.mxu0 %v130
    %162 = vmatmul.f32.gmra.mxu0 %v128
    %v163 = vpop.f32.mrf.mxu0
    %v164 = vadd.f32 0.0, %v163
    %165 = vdwg.mxu0
    %v166 = vmin.f32 %v128, %v164
    %s167 = scalar_lea.vmem [#allocation2], 256
    %v168 = vld [vmem:[%s167] sm:$0xff]
    %v169 = vld [vmem:[%s167 + $0x8] sm:$0xff]
    %v170 = vld [vmem:[%s167 + $0x10] sm:$0xff]
    %v171 = vld [vmem:[%s167 + $0x18] sm:$0xff]
    %v172 = vld [vmem:[%s167 + $0x20] sm:$0xff]
    %v173 = vld [vmem:[%s167 + $0x28] sm:$0xff]
    %v174 = vld [vmem:[%s167 + $0x30] sm:$0xff]
    %v175 = vld [vmem:[%s167 + $0x38] sm:$0xff]
    %v176 = vld [vmem:[%s167 + $0x40] sm:$0xff]
    %v177 = vld [vmem:[%s167 + $0x48] sm:$0xff]
    %v178 = vld [vmem:[%s167 + $0x50] sm:$0xff]
    %v179 = vld [vmem:[%s167 + $0x58] sm:$0xff]
    %v180 = vld [vmem:[%s167 + $0x60] sm:$0xff]
    %v181 = vld [vmem:[%s167 + $0x68] sm:$0xff]
    %v182 = vld [vmem:[%s167 + $0x70] sm:$0xff]
    %v183 = vld [vmem:[%s167 + $0x78] sm:$0xff]
    %184 = vmatpush.msra.mxu0 %v183
    %185 = vmatpush.msra.mxu0 %v182
    %186 = vmatpush.msra.mxu0 %v181
    %187 = vmatpush.msra.mxu0 %v180
    %188 = vmatpush.msra.mxu0 %v179
    %189 = vmatpush.msra.mxu0 %v178
    %190 = vmatpush.msra.mxu0 %v177
    %191 = vmatpush.msra.mxu0 %v176
    %192 = vmatpush.msra.mxu0 %v175
    %193 = vmatpush.msra.mxu0 %v174
    %194 = vmatpush.msra.mxu0 %v173
    %195 = vmatpush.msra.mxu0 %v172
    %196 = vmatpush.msra.mxu0 %v171
    %197 = vmatpush.msra.mxu0 %v170
    %198 = vmatpush.msra.mxu0 %v169
    %199 = vmatpush.msra.mxu0 %v168
    %200 = vmatmul.f32.gmra.mxu0 %v166
    %v201 = vpop.f32.mrf.mxu0
    %v202 = vadd.f32 0.0, %v201
    %203 = vdwg.mxu0
    %v204 = vmin.f32 %v166, %v202
    %s205 = scalar_lea.vmem [#allocation2], 384
    %v206 = vld [vmem:[%s205] sm:$0xff]
    %v207 = vld [vmem:[%s205 + $0x8] sm:$0xff]
    %v208 = vld [vmem:[%s205 + $0x10] sm:$0xff]
    %v209 = vld [vmem:[%s205 + $0x18] sm:$0xff]
    %v210 = vld [vmem:[%s205 + $0x20] sm:$0xff]
    %v211 = vld [vmem:[%s205 + $0x28] sm:$0xff]
    %v212 = vld [vmem:[%s205 + $0x30] sm:$0xff]
    %v213 = vld [vmem:[%s205 + $0x38] sm:$0xff]
    %v214 = vld [vmem:[%s205 + $0x40] sm:$0xff]
    %v215 = vld [vmem:[%s205 + $0x48] sm:$0xff]
    %v216 = vld [vmem:[%s205 + $0x50] sm:$0xff]
    %v217 = vld [vmem:[%s205 + $0x58] sm:$0xff]
    %v218 = vld [vmem:[%s205 + $0x60] sm:$0xff]
    %v219 = vld [vmem:[%s205 + $0x68] sm:$0xff]
    %v220 = vld [vmem:[%s205 + $0x70] sm:$0xff]
    %v221 = vld [vmem:[%s205 + $0x78] sm:$0xff]
    %222 = vmatpush.msra.mxu0 %v221
    %223 = vmatpush.msra.mxu0 %v220
    %224 = vmatpush.msra.mxu0 %v219
    %225 = vmatpush.msra.mxu0 %v218
    %226 = vmatpush.msra.mxu0 %v217
    %227 = vmatpush.msra.mxu0 %v216
    %228 = vmatpush.msra.mxu0 %v215
    %229 = vmatpush.msra.mxu0 %v214
    %230 = vmatpush.msra.mxu0 %v213
    %231 = vmatpush.msra.mxu0 %v212
    %232 = vmatpush.msra.mxu0 %v211
    %233 = vmatpush.msra.mxu0 %v210
    %234 = vmatpush.msra.mxu0 %v209
    %235 = vmatpush.msra.mxu0 %v208
    %236 = vmatpush.msra.mxu0 %v207
    %237 = vmatpush.msra.mxu0 %v206
    %238 = vmatmul.f32.gmra.mxu0 %v204
    %v239 = vpop.f32.mrf.mxu0
    %v240 = vadd.f32 0.0, %v239
    %241 = vdwg.mxu0
    %v242 = vmin.f32 %v204, %v240
    %v243 = vld [vmem:[#allocation5] sm:$0xff]
    %v244 = vld [vmem:[#allocation5 + $0x8] sm:$0xff]
    %v245 = vld [vmem:[#allocation5 + $0x10] sm:$0xff]
    %v246 = vld [vmem:[#allocation5 + $0x18] sm:$0xff]
    %v247 = vld [vmem:[#allocation5 + $0x20] sm:$0xff]
    %v248 = vld [vmem:[#allocation5 + $0x28] sm:$0xff]
    %v249 = vld [vmem:[#allocation5 + $0x30] sm:$0xff]
    %v250 = vld [vmem:[#allocation5 + $0x38] sm:$0xff]
    %v251 = vld [vmem:[#allocation5 + $0x40] sm:$0xff]
    %v252 = vld [vmem:[#allocation5 + $0x48] sm:$0xff]
    %v253 = vld [vmem:[#allocation5 + $0x50] sm:$0xff]
    %v254 = vld [vmem:[#allocation5 + $0x58] sm:$0xff]
    %v255 = vld [vmem:[#allocation5 + $0x60] sm:$0xff]
    %v256 = vld [vmem:[#allocation5 + $0x68] sm:$0xff]
    %v257 = vld [vmem:[#allocation5 + $0x70] sm:$0xff]
    %v258 = vld [vmem:[#allocation5 + $0x78] sm:$0xff]
    %v259 = vld [vmem:[#allocation5 + $0x80] sm:$0xff]
    %v260 = vld [vmem:[#allocation5 + $0x88] sm:$0xff]
    %v261 = vld [vmem:[#allocation5 + $0x90] sm:$0xff]
    %v262 = vld [vmem:[#allocation5 + $0x98] sm:$0xff]
    %v263 = vld [vmem:[#allocation5 + $0xa0] sm:$0xff]
    %v264 = vld [vmem:[#allocation5 + $0xa8] sm:$0xff]
    %v265 = vld [vmem:[#allocation5 + $0xb0] sm:$0xff]
    %v266 = vld [vmem:[#allocation5 + $0xb8] sm:$0xff]
    %v267 = vld [vmem:[#allocation5 + $0xc0] sm:$0xff]
    %v268 = vld [vmem:[#allocation5 + $0xc8] sm:$0xff]
    %v269 = vld [vmem:[#allocation5 + $0xd0] sm:$0xff]
    %v270 = vld [vmem:[#allocation5 + $0xd8] sm:$0xff]
    %v271 = vld [vmem:[#allocation5 + $0xe0] sm:$0xff]
    %v272 = vld [vmem:[#allocation5 + $0xe8] sm:$0xff]
    %v273 = vld [vmem:[#allocation5 + $0xf0] sm:$0xff]
    %v274 = vld [vmem:[#allocation5 + $0xf8] sm:$0xff]
    %275 = vmatpush.msra.mxu0 %v273
    %276 = vmatpush.msra.mxu0 %v271
    %277 = vmatpush.msra.mxu0 %v269
    %278 = vmatpush.msra.mxu0 %v267
    %279 = vmatpush.msra.mxu0 %v265
    %280 = vmatpush.msra.mxu0 %v263
    %281 = vmatpush.msra.mxu0 %v261
    %282 = vmatpush.msra.mxu0 %v259
    %283 = vmatpush.msra.mxu0 %v257
    %284 = vmatpush.msra.mxu0 %v255
    %285 = vmatpush.msra.mxu0 %v253
    %286 = vmatpush.msra.mxu0 %v251
    %287 = vmatpush.msra.mxu0 %v249
    %288 = vmatpush.msra.mxu0 %v247
    %289 = vmatpush.msra.mxu0 %v245
    %290 = vmatpush.msra.mxu0 %v243
    %291 = vmatmul.f32.gmra.mxu0 %v242
    %v292 = vpop.f32.mrf.mxu0
    %v293 = vadd.f32 0.0, %v292
    %294 = vdwg.mxu0
    %295 = vmatpush.msra.mxu0 %v274
    %296 = vmatpush.msra.mxu0 %v272
    %297 = vmatpush.msra.mxu0 %v270
    %298 = vmatpush.msra.mxu0 %v268
    %299 = vmatpush.msra.mxu0 %v266
    %300 = vmatpush.msra.mxu0 %v264
    %301 = vmatpush.msra.mxu0 %v262
    %302 = vmatpush.msra.mxu0 %v260
    %303 = vmatpush.msra.mxu0 %v258
    %304 = vmatpush.msra.mxu0 %v256
    %305 = vmatpush.msra.mxu0 %v254
    %306 = vmatpush.msra.mxu0 %v252
    %307 = vmatpush.msra.mxu0 %v250
    %308 = vmatpush.msra.mxu0 %v248
    %309 = vmatpush.msra.mxu0 %v246
    %310 = vmatpush.msra.mxu0 %v244
    %311 = vmatmul.f32.gmra.mxu0 %v242
    %v312 = vpop.f32.mrf.mxu0
    %v313 = vadd.f32 0.0, %v312
    %314 = vdwg.mxu0
    %315 = vmatpush.msra.mxu0 %v90
    %316 = vmatpush.msra.mxu0 %v88
    %317 = vmatpush.msra.mxu0 %v86
    %318 = vmatpush.msra.mxu0 %v84
    %319 = vmatpush.msra.mxu0 %v82
    %320 = vmatpush.msra.mxu0 %v80
    %321 = vmatpush.msra.mxu0 %v78
    %322 = vmatpush.msra.mxu0 %v76
    %323 = vmatpush.msra.mxu0 %v74
    %324 = vmatpush.msra.mxu0 %v72
    %325 = vmatpush.msra.mxu0 %v70
    %326 = vmatpush.msra.mxu0 %v68
    %327 = vmatpush.msra.mxu0 %v66
    %328 = vmatpush.msra.mxu0 %v64
    %329 = vmatpush.msra.mxu0 %v62
    %330 = vmatpush.msra.mxu0 %v60
    %331 = vmatmul.f32.gmra.mxu0 %v59
    %v332 = vpop.f32.mrf.mxu0
    %v333 = vadd.f32 %v293, %v332
    %334 = vdwg.mxu0
    %335 = vmatpush.msra.mxu0 %v91
    %336 = vmatpush.msra.mxu0 %v89
    %337 = vmatpush.msra.mxu0 %v87
    %338 = vmatpush.msra.mxu0 %v85
    %339 = vmatpush.msra.mxu0 %v83
    %340 = vmatpush.msra.mxu0 %v81
    %341 = vmatpush.msra.mxu0 %v79
    %342 = vmatpush.msra.mxu0 %v77
    %343 = vmatpush.msra.mxu0 %v75
    %344 = vmatpush.msra.mxu0 %v73
    %345 = vmatpush.msra.mxu0 %v71
    %346 = vmatpush.msra.mxu0 %v69
    %347 = vmatpush.msra.mxu0 %v67
    %348 = vmatpush.msra.mxu0 %v65
    %349 = vmatpush.msra.mxu0 %v63
    %350 = vmatpush.msra.mxu0 %v61
    %351 = vmatmul.f32.gmra.mxu0 %v59
    %v352 = vpop.f32.mrf.mxu0
    %v353 = vadd.f32 %v313, %v352
    %354 = vdwg.mxu0
    %v355 = vld [vmem:[%s4] sm:$0x3]
    %v357 = vperm.slane %v355, 0
    %v358 = vperm.slane %v355, 1
    %v361 = vadd.f32 %v333, %v357
    %v362 = vadd.f32 %v353, %v358
    %vm363 = vcmp.ge.f32.partialorder %v361, 0.0
    %vm364 = vcmp.ge.f32.partialorder %v362, 0.0
    %v365 = vmul.f32 %v361, 0.01
    %v366 = vmul.f32 %v362, 0.01
    %v367 = vsel %vm363, %v361, %v365
    %v368 = vsel %vm364, %v362, %v366
    %v369 = vld [vmem:[%s5] sm:$0xff]
    %v370 = vld [vmem:[%s5 + $0x8] sm:$0xff]
    %v371 = vld [vmem:[%s5 + $0x10] sm:$0xff]
    %v372 = vld [vmem:[%s5 + $0x18] sm:$0xff]
    %v373 = vld [vmem:[%s5 + $0x20] sm:$0xff]
    %v374 = vld [vmem:[%s5 + $0x28] sm:$0xff]
    %v375 = vld [vmem:[%s5 + $0x30] sm:$0xff]
    %v376 = vld [vmem:[%s5 + $0x38] sm:$0xff]
    %v377 = vld [vmem:[%s5 + $0x40] sm:$0xff]
    %v378 = vld [vmem:[%s5 + $0x48] sm:$0xff]
    %v379 = vld [vmem:[%s5 + $0x50] sm:$0xff]
    %v380 = vld [vmem:[%s5 + $0x58] sm:$0xff]
    %v381 = vld [vmem:[%s5 + $0x60] sm:$0xff]
    %v382 = vld [vmem:[%s5 + $0x68] sm:$0xff]
    %v383 = vld [vmem:[%s5 + $0x70] sm:$0xff]
    %v384 = vld [vmem:[%s5 + $0x78] sm:$0xff]
    %v385 = vld [vmem:[%s5 + $0x80] sm:$0xff]
    %v386 = vld [vmem:[%s5 + $0x88] sm:$0xff]
    %v387 = vld [vmem:[%s5 + $0x90] sm:$0xff]
    %v388 = vld [vmem:[%s5 + $0x98] sm:$0xff]
    %v389 = vld [vmem:[%s5 + $0xa0] sm:$0xff]
    %v390 = vld [vmem:[%s5 + $0xa8] sm:$0xff]
    %v391 = vld [vmem:[%s5 + $0xb0] sm:$0xff]
    %v392 = vld [vmem:[%s5 + $0xb8] sm:$0xff]
    %v393 = vld [vmem:[%s5 + $0xc0] sm:$0xff]
    %v394 = vld [vmem:[%s5 + $0xc8] sm:$0xff]
    %v395 = vld [vmem:[%s5 + $0xd0] sm:$0xff]
    %v396 = vld [vmem:[%s5 + $0xd8] sm:$0xff]
    %v397 = vld [vmem:[%s5 + $0xe0] sm:$0xff]
    %v398 = vld [vmem:[%s5 + $0xe8] sm:$0xff]
    %v399 = vld [vmem:[%s5 + $0xf0] sm:$0xff]
    %v400 = vld [vmem:[%s5 + $0xf8] sm:$0xff]
    %v401 = vld [vmem:[%s6] sm:$0x1]
    %v403 = vperm.slane %v401, 0
    %405 = vmatpush.msra.mxu0 %v384
    %406 = vmatpush.msra.mxu0 %v383
    %407 = vmatpush.msra.mxu0 %v382
    %408 = vmatpush.msra.mxu0 %v381
    %409 = vmatpush.msra.mxu0 %v380
    %410 = vmatpush.msra.mxu0 %v379
    %411 = vmatpush.msra.mxu0 %v378
    %412 = vmatpush.msra.mxu0 %v377
    %413 = vmatpush.msra.mxu0 %v376
    %414 = vmatpush.msra.mxu0 %v375
    %415 = vmatpush.msra.mxu0 %v374
    %416 = vmatpush.msra.mxu0 %v373
    %417 = vmatpush.msra.mxu0 %v372
    %418 = vmatpush.msra.mxu0 %v371
    %419 = vmatpush.msra.mxu0 %v370
    %420 = vmatpush.msra.mxu0 %v369
    %421 = vmatmul.f32.gmra.mxu0 %v367
    %v422 = vpop.f32.mrf.mxu0
    %v423 = vadd.f32 %v403, %v422
    %424 = vdwg.mxu0
    %425 = vmatpush.msra.mxu0 %v400
    %426 = vmatpush.msra.mxu0 %v399
    %427 = vmatpush.msra.mxu0 %v398
    %428 = vmatpush.msra.mxu0 %v397
    %429 = vmatpush.msra.mxu0 %v396
    %430 = vmatpush.msra.mxu0 %v395
    %431 = vmatpush.msra.mxu0 %v394
    %432 = vmatpush.msra.mxu0 %v393
    %433 = vmatpush.msra.mxu0 %v392
    %434 = vmatpush.msra.mxu0 %v391
    %435 = vmatpush.msra.mxu0 %v390
    %436 = vmatpush.msra.mxu0 %v389
    %437 = vmatpush.msra.mxu0 %v388
    %438 = vmatpush.msra.mxu0 %v387
    %439 = vmatpush.msra.mxu0 %v386
    %440 = vmatpush.msra.mxu0 %v385
    %441 = vmatmul.f32.gmra.mxu0 %v368
    %v442 = vpop.f32.mrf.mxu0
    %v443 = vadd.f32 %v423, %v442
    %444 = vdwg.mxu0
    %v445 = vmax.f32 %v443, 0.0
    %vm446 = vcmask 64512
    %447 = vst.msk [vmem:[#allocation7] sm:$0xff] %vm446, %v445
    // Predicated region
    $region38: #{tpu_custom_call.1} parent=1 // pred_check
      _
    $region39: #{tpu_custom_call.1} parent=1 // pred_check_branch
      %449 = sbr.rel (0) target = $region41
    $region40: #{tpu_custom_call.1} parent=1 // pred_region
      %451 = vsyncadd [#allocation4], 0
      %s453 = sshll.u32 [#allocation7], 4
      %s454 = int_to_ptr.vmem [resolvable:$true] %s453
      %s455 = sshll.u32 %s7, 4
      %s456 = int_to_ptr.hbm [resolvable:$true] %s455
      %458 = dma.vmem_to_hbm [thread:$0]  %s454, 128, %s456, [#allocation4]
    $region41: #{tpu_custom_call.1} parent=1 // pred_fallthru
      _
    // Predicated region
    $region42: #{tpu_custom_call.1} parent=1 // pred_check
      _
    $region43: #{tpu_custom_call.1} parent=1 // pred_check_branch
      %460 = sbr.rel (0) target = $region45
    $region44: #{tpu_custom_call.1} parent=1 // pred_region
      %462 = dma.done [#allocation4], 128
    $region45: #{tpu_custom_call.1} parent=1 // pred_fallthru
      _
    %463 = vsyncpa [#allocation3], 1
    %464 = vsyncpa [#allocation6], 1
    %465 = vsyncpa [#allocation4], 1

</llo_original>
